<compile_context>
chip_gen: v5e
topology: v5e:2x2
jax: 0.10.0
libtpu: 0.0.40
codegen_flags: <defaults>
</compile_context>

<pallas_src>
import functools

import jax
import jax.numpy as jnp
from jax.experimental import pallas as pl
from jax.experimental.pallas import tpu as pltpu

LANE = 128


def _round_up(x, m):
    return ((x + m - 1) // m) * m


# ----------------------------------------------------------------------------
# Fused Pallas kernel: the full SAGEConv stack, one grid step per layer.
# ----------------------------------------------------------------------------
def _fused_graphsage_kernel(adj_ref, feat_ref, wcat_ref, bias_ref, o_ref,
                            h_scratch, *, f_pad):
    l = pl.program_id(0)
    n_layers = pl.num_programs(0)

    # Layer 0: load the (padded) input features into the resident h buffer.
    @pl.when(l == 0)
    def _():
        h_scratch[...] = feat_ref[...]

    h = h_scratch[...]                                  # [N_pad, F_pad] f32
    h_bf = h.astype(jnp.bfloat16)

    # Merged projection: h @ [W_self | W_neigh]  -> [N_pad, 2*F_pad] (f32 acc).
    wcat = wcat_ref[0]                                  # [F_pad, 2*F_pad] bf16
    hw = jnp.dot(h_bf, wcat, preferred_element_type=jnp.float32)
    self_part = hw[:, :f_pad]                           # h @ W_self
    neigh_proj = hw[:, f_pad:]                          # h @ W_neigh

    # Neighbor mean aggregation after projection: A_norm @ (h @ W_neigh).
    neigh = jnp.dot(adj_ref[...], neigh_proj.astype(jnp.bfloat16),
                    preferred_element_type=jnp.float32)

    out = self_part + neigh + bias_ref[0]               # bias [1, F_pad] bcast

    # ReLU on every layer except the last; epilogue stays f32.
    @pl.when(l < n_layers - 1)
    def _():
        h_scratch[...] = jnp.maximum(out, 0.0)

    # Only the final layer's activations ever leave VMEM.
    @pl.when(l == n_layers - 1)
    def _():
        o_ref[...] = out


def fused_graphsage(adj_bf16, feat_f32, wcat_bf16, bias_f32, *, n_layers, f_pad):
    n_pad = adj_bf16.shape[0]
    kernel = functools.partial(_fused_graphsage_kernel, f_pad=f_pad)
    return pl.pallas_call(
        kernel,
        out_shape=jax.ShapeDtypeStruct((n_pad, f_pad), jnp.float32),
        grid_spec=pltpu.PrefetchScalarGridSpec(
            num_scalar_prefetch=0,
            grid=(n_layers,),
            in_specs=[
                # Adjacency: constant block index -> DMA'd once, VMEM-resident.
                pl.BlockSpec((n_pad, n_pad), lambda l: (0, 0)),
                # Padded input features (read only at layer 0).
                pl.BlockSpec((n_pad, f_pad), lambda l: (0, 0)),
                # Per-layer merged weights [W_self | W_neigh] (bf16).
                pl.BlockSpec((1, f_pad, 2 * f_pad), lambda l: (l, 0, 0)),
                # Per-layer bias (f32).
                pl.BlockSpec((1, 1, f_pad), lambda l: (l, 0, 0)),
            ],
            out_specs=pl.BlockSpec((n_pad, f_pad), lambda l: (0, 0)),
            scratch_shapes=[pltpu.VMEM((n_pad, f_pad), jnp.float32)],
        ),
        compiler_params=pltpu.CompilerParams(
            dimension_semantics=("arbitrary",),   # h carried across layers
            vmem_limit_bytes=48 << 20,            # headroom for v7x (64 MiB)
        ),
    )(adj_bf16, feat_f32, wcat_bf16, bias_f32)


# ----------------------------------------------------------------------------
# GraphSage module: parameter construction + padding / packing for the kernel.
# ----------------------------------------------------------------------------
class GraphSagePallas:
    def __init__(self, in_feats, layer_sizes, n_classes, aggregator_type,
                 dropout, key):
        assert aggregator_type == "mean"
        # TODO(synk): feat_drop (dropout) is a no-op here (inference/eval mode).
        self.dropout = dropout
        dims = [in_feats] + list(layer_sizes) + [n_classes]
        self.n_classes = n_classes
        self.n_layers = len(dims) - 1
        # Common lane-dense padded feature width (multiple of 128).
        self.f_pad = _round_up(max(dims), LANE)

        self.params = []          # original-shape params (for the reference)
        wcat_list, bias_list = [], []
        for i in range(self.n_layers):
            f_in, f_out = dims[i], dims[i + 1]
            key, k1, k2 = jax.random.split(key, 3)
            scale = (2.0 / (f_in + f_out)) ** 0.5  # xavier-ish, deterministic
            w_self = scale * jax.random.normal(k1, (f_in, f_out), jnp.float32)
            w_neigh = scale * jax.random.normal(k2, (f_in, f_out), jnp.float32)
            bias = jnp.zeros((f_out,), jnp.float32)
            last = i == self.n_layers - 1
            self.params.append((w_self, w_neigh, bias, not last))

            # Zero-padded, lane-dense, merged [W_self | W_neigh] in bf16.
            ws_p = jnp.zeros((self.f_pad, self.f_pad), jnp.float32)
            ws_p = ws_p.at[:f_in, :f_out].set(w_self)
            wn_p = jnp.zeros((self.f_pad, self.f_pad), jnp.float32)
            wn_p = wn_p.at[:f_in, :f_out].set(w_neigh)
            wcat_list.append(
                jnp.concatenate([ws_p, wn_p], axis=1).astype(jnp.bfloat16))
            bias_list.append(
                jnp.zeros((1, self.f_pad), jnp.float32).at[0, :f_out].set(bias))

        self.wcat = jnp.stack(wcat_list)     # [L, F_pad, 2*F_pad] bf16
        self.bias = jnp.stack(bias_list)     # [L, 1, F_pad]       f32

    def __call__(self, adj_norm, features):
        n = features.shape[0]
        n_pad = _round_up(n, 16)             # bf16 sublane packing
        f_pad = self.f_pad

        # Pad + cast once at the boundary; padded rows/lanes are zero so they
        # never leak into real outputs (padded weight rows/cols are zero too).
        adj_p = jnp.zeros((n_pad, n_pad), jnp.float32)
        adj_p = adj_p.at[:n, :n].set(adj_norm).astype(jnp.bfloat16)
        feat_p = jnp.zeros((n_pad, f_pad), jnp.float32)
        feat_p = feat_p.at[:n, :features.shape[1]].set(features)

        out_p = fused_graphsage(adj_p, feat_p, self.wcat, self.bias,
                                n_layers=self.n_layers, f_pad=f_pad)
        return out_p[:n, :self.n_classes]


# Pure-JAX reference for correctness checking (f32, unpadded).
def graphsage_ref(adj_norm, features, params):
    h = features
    for w_self, w_neigh, bias, relu in params:
        h_neigh = adj_norm @ h
        out = h @ w_self + h_neigh @ w_neigh + bias[None, :]
        h = jnp.maximum(out, 0.0) if relu else out
    return h


if __name__ == "__main__":
    key = jax.random.PRNGKey(0)

    # Small, module-consistent shapes.
    N = 64            # number of graph nodes
    in_feats = 16
    layer_sizes = [32, 32]
    n_classes = 8
    dropout = 0.1     # identity at inference

    k_adj, k_feat, k_param = jax.random.split(key, 3)

    # Deterministic random graph: dense 0/1 adjacency, row-normalized (mean).
    adj = (jax.random.uniform(k_adj, (N, N)) < 0.15).astype(jnp.float32)
    deg = jnp.maximum(adj.sum(axis=1, keepdims=True), 1.0)
    adj_norm = adj / deg                                    # [N, N]

    features = jax.random.normal(k_feat, (N, in_feats), jnp.float32)

    model = GraphSagePallas(in_feats, layer_sizes, n_classes,
                            aggregator_type="mean", dropout=dropout,
                            key=k_param)

    out = jax.block_until_ready(model(adj_norm, features))

    ref = graphsage_ref(adj_norm, features, model.params)
    assert out.shape == (N, n_classes), out.shape
    # bf16 MXU operands with f32 accumulation: compare with a global-relative
    # tolerance instead of elementwise 1e-4.
    rel_err = float(jnp.max(jnp.abs(out - ref)) /
                    (jnp.max(jnp.abs(ref)) + 1e-6))
    assert rel_err < 5e-2, f"mismatch vs reference: rel_err={rel_err}"

    print("KERNEL_OK")
</pallas_src>

<mosaic_0001>
module attributes {stable_mosaic.version = 11 : i64} {
  func.func @_fused_graphsage_kernel(%arg0: i32, %arg1: memref<64x64xbf16, #tpu.memory_space<vmem>>, %arg2: memref<64x128xf32, #tpu.memory_space<vmem>>, %arg3: memref<1x128x256xbf16, #tpu.memory_space<vmem>>, %arg4: memref<1x1x128xf32, #tpu.memory_space<vmem>>, %arg5: memref<64x128xf32, #tpu.memory_space<vmem>>, %arg6: memref<64x128xf32, #tpu.memory_space<vmem>>) attributes {dimension_semantics = [#tpu.dimension_semantics<arbitrary>], iteration_bounds = array<i64: 3>, scalar_prefetch = 0 : i64, scratch_operands = 1 : i64, tpu.core_type = #tpu.core_type<tc>, window_params = [{pipeline_mode = #tpu.pipeline_mode<synchronous>, transform_indices = @transform_0, window_bounds = array<i64: 64, 64>}, {pipeline_mode = #tpu.pipeline_mode<synchronous>, transform_indices = @transform_1, window_bounds = array<i64: 64, 128>}, {transform_indices = @transform_2, window_bounds = array<i64: 1, 128, 256>}, {transform_indices = @transform_3, window_bounds = array<i64: 1, 1, 128>}, {pipeline_mode = #tpu.pipeline_mode<synchronous>, transform_indices = @transform_4, window_bounds = array<i64: 64, 128>}]} {
    %c0_i32 = arith.constant 0 : i32
    %0 = arith.cmpi eq, %arg0, %c0_i32 : i32
    %1 = arith.extui %0 : i1 to i32
    %c0_i32_0 = arith.constant 0 : i32
    %2 = arith.cmpi ne, %1, %c0_i32_0 : i32
    scf.if %2 {
      %c0_14 = arith.constant 0 : index
      %c0_15 = arith.constant 0 : index
      %24 = vector.load %arg2[%c0_14, %c0_15] : memref<64x128xf32, #tpu.memory_space<vmem>>, vector<64x128xf32>
      %c0_16 = arith.constant 0 : index
      %c0_17 = arith.constant 0 : index
      %25 = vector.load %arg6[%c0_16, %c0_17] : memref<64x128xf32, #tpu.memory_space<vmem>>, vector<64x128xf32>
      tpu.vector_store %arg6[%c0_16, %c0_17], %24 {strides = array<i32>} : memref<64x128xf32, #tpu.memory_space<vmem>>, vector<64x128xf32>,
    } else {
    }
    %c0 = arith.constant 0 : index
    %c0_1 = arith.constant 0 : index
    %3 = vector.load %arg6[%c0, %c0_1] : memref<64x128xf32, #tpu.memory_space<vmem>>, vector<64x128xf32>
    %4 = arith.truncf %3 : vector<64x128xf32> to vector<64x128xbf16>
    %c0_2 = arith.constant 0 : index
    %c0_3 = arith.constant 0 : index
    %c0_4 = arith.constant 0 : index
    %5 = vector.load %arg3[%c0_2, %c0_3, %c0_4] : memref<1x128x256xbf16, #tpu.memory_space<vmem>>, vector<1x128x256xbf16>
    %6 = vector.shape_cast %5 : vector<1x128x256xbf16> to vector<128x256xbf16>
    %cst = arith.constant dense<0.000000e+00> : vector<64x256xf32>
    %7 = tpu.matmul %4, %6, %cst {dimension_numbers = #tpu.dot_dimension_numbers<[1], [0], [0], [1], [0, 0, 1, 1], [], []>} : vector<64x128xbf16>, vector<128x256xbf16>, vector<64x256xf32> -> vector<64x256xf32>
    %8 = vector.extract_strided_slice %7 {offsets = [0, 0], sizes = [64, 128], strides = [1, 1]} : vector<64x256xf32> to vector<64x128xf32>
    %9 = vector.extract_strided_slice %7 {offsets = [0, 128], sizes = [64, 128], strides = [1, 1]} : vector<64x256xf32> to vector<64x128xf32>
    %c0_5 = arith.constant 0 : index
    %c0_6 = arith.constant 0 : index
    %10 = vector.load %arg1[%c0_5, %c0_6] : memref<64x64xbf16, #tpu.memory_space<vmem>>, vector<64x64xbf16>
    %11 = arith.truncf %9 : vector<64x128xf32> to vector<64x128xbf16>
    %cst_7 = arith.constant dense<0.000000e+00> : vector<64x128xf32>
    %12 = tpu.matmul %10, %11, %cst_7 {dimension_numbers = #tpu.dot_dimension_numbers<[1], [0], [0], [1], [0, 0, 1, 1], [], []>} : vector<64x64xbf16>, vector<64x128xbf16>, vector<64x128xf32> -> vector<64x128xf32>
    %13 = arith.addf %8, %12 : vector<64x128xf32>
    %c0_8 = arith.constant 0 : index
    %c0_9 = arith.constant 0 : index
    %c0_10 = arith.constant 0 : index
    %14 = vector.load %arg4[%c0_8, %c0_9, %c0_10] : memref<1x1x128xf32, #tpu.memory_space<vmem>>, vector<1x1x128xf32>
    %15 = vector.shape_cast %14 : vector<1x1x128xf32> to vector<1x128xf32>
    %16 = vector.broadcast %15 : vector<1x128xf32> to vector<64x128xf32>
    %17 = arith.addf %13, %16 : vector<64x128xf32>
    %c2_i32 = arith.constant 2 : i32
    %18 = arith.cmpi slt, %arg0, %c2_i32 : i32
    %19 = arith.extui %18 : i1 to i32
    %c0_i32_11 = arith.constant 0 : i32
    %20 = arith.cmpi ne, %19, %c0_i32_11 : i32
    scf.if %20 {
      %cst_14 = arith.constant 0.000000e+00 : f32
      %24 = vector.broadcast %cst_14 : f32 to vector<64x128xf32>
      %25 = arith.maximumf %17, %24 : vector<64x128xf32>
      %c0_15 = arith.constant 0 : index
      %c0_16 = arith.constant 0 : index
      %26 = vector.load %arg6[%c0_15, %c0_16] : memref<64x128xf32, #tpu.memory_space<vmem>>, vector<64x128xf32>
      tpu.vector_store %arg6[%c0_15, %c0_16], %25 {strides = array<i32>} : memref<64x128xf32, #tpu.memory_space<vmem>>, vector<64x128xf32>,
    } else {
    }
    %c2_i32_12 = arith.constant 2 : i32
    %21 = arith.cmpi eq, %arg0, %c2_i32_12 : i32
    %22 = arith.extui %21 : i1 to i32
    %c0_i32_13 = arith.constant 0 : i32
    %23 = arith.cmpi ne, %22, %c0_i32_13 : i32
    scf.if %23 {
      %c0_14 = arith.constant 0 : index
      %c0_15 = arith.constant 0 : index
      %24 = vector.load %arg5[%c0_14, %c0_15] : memref<64x128xf32, #tpu.memory_space<vmem>>, vector<64x128xf32>
      tpu.vector_store %arg5[%c0_14, %c0_15], %17 {strides = array<i32>} : memref<64x128xf32, #tpu.memory_space<vmem>>, vector<64x128xf32>,
    } else {
    }
    return
  }
  func.func @transform_0(%arg0: i32) -> (i32, i32) {
    %c0_i32 = arith.constant 0 : i32
    %c0_i32_0 = arith.constant 0 : i32
    %c0_i32_1 = arith.constant 0 : i32
    return %c0_i32, %c0_i32_0 : i32, i32
  }
  func.func @transform_1(%arg0: i32) -> (i32, i32) {
    %c0_i32 = arith.constant 0 : i32
    %c0_i32_0 = arith.constant 0 : i32
    %c0_i32_1 = arith.constant 0 : i32
    return %c0_i32, %c0_i32_0 : i32, i32
  }
  func.func @transform_2(%arg0: i32) -> (i32, i32, i32) {
    %c0_i32 = arith.constant 0 : i32
    %c0_i32_0 = arith.constant 0 : i32
    %c0_i32_1 = arith.constant 0 : i32
    return %arg0, %c0_i32, %c0_i32_0 : i32, i32, i32
  }
  func.func @transform_3(%arg0: i32) -> (i32, i32, i32) {
    %c0_i32 = arith.constant 0 : i32
    %c0_i32_0 = arith.constant 0 : i32
    %c0_i32_1 = arith.constant 0 : i32
    return %arg0, %c0_i32, %c0_i32_0 : i32, i32, i32
  }
  func.func @transform_4(%arg0: i32) -> (i32, i32) {
    %c0_i32 = arith.constant 0 : i32
    %c0_i32_0 = arith.constant 0 : i32
    %c0_i32_1 = arith.constant 0 : i32
    return %c0_i32, %c0_i32_0 : i32, i32
  }
}

</mosaic_0001>

<llo_original>
// kernel: tpu_custom_call.1
$region0: #{tpu_custom_call.1}
  #allocation0 [shape = 'u32[]', space=smem, size = 0x4, offset = 0x4, fixed_abs, tag = 'smem constant byte address 0x4 - core index']
  #allocation1 [shape = 'u32[72,128]{1,0:T(1,128)}', space=vmem, size = 0x9000, scoped, tag = 'internal scratch']
  #allocation2 [shape = 'f32[64,128]{1,0:T(8,128)}', space=vmem, size = 0x8000, scoped, tag = 'scratch operand']
  %s0 = inlined_call_operand.hbm [shape: bf16[64,64], index: 0, kind: input, shape index: {}]
  %s1 = inlined_call_operand.hbm [shape: f32[64,128], index: 1, kind: input, shape index: {}]
  %s2 = inlined_call_operand.hbm [shape: bf16[3,128,256], index: 2, kind: input, shape index: {}]
  %s3 = inlined_call_operand.hbm [shape: f32[3,1,128], index: 3, kind: input, shape index: {}]
  %s4 = inlined_call_operand.hbm [shape: f32[64,128], index: 4, kind: output, shape index: {}]
  %s5 = sld [smem:[#allocation0]]
  $region77: #{tpu_custom_call.1} parent=0
    _
  %s7 = ssub.s32 1, %s5
  %s8 = scalar_select 0, %s7, %s5
  $region1: #{tpu_custom_call.1} parent=0
    #allocation3 [shape = 'u8[16384]{0}', space=vmem, size = 0x4000, scoped, tag = 'input window, operand 0, single buffered']
    #allocation4 [shape = 's32[2]{0}', space=sflag, size = 0x8, scoped, tag = 'scoped memory for tpu_custom_call.1']
    #allocation5 [shape = 's32[2]{0}', space=sflag, size = 0x8, scoped, tag = 'scoped memory for tpu_custom_call.1']
    #allocation6 [shape = 'u8[32768]{0}', space=vmem, size = 0x8000, scoped, tag = 'input window, operand 1, single buffered']
    #allocation7 [shape = 's32[1]{0}', space=sflag, size = 0x4, scoped, tag = 'scoped memory for tpu_custom_call.1']
    #allocation8 [shape = 'u8[131072]{0}', space=vmem, size = 0x20000, scoped, tag = 'input window, operand 2']
    #allocation9 [shape = 'u8[1024]{0}', space=vmem, size = 0x400, scoped, tag = 'input window, operand 3']
    #allocation10 [shape = 'u8[32768]{0}', space=vmem, size = 0x8000, scoped, tag = 'output window, operand 0, single buffered']
    %9 = vsyncpa [#allocation4], 0
    %10 = vsyncpa [#allocation7], 0
    %11 = vsyncpa [#allocation5], 0
    loop: start=0, step=1, limit=5
    $region2: #{tpu_custom_call.1} parent=1 // loop_pre_header
      _
    $region3: #{tpu_custom_call.1} parent=1 // loop_header
      %s13 = sphi 0, %s17
      %p14 = scmp.ge.s32.totalorder %s13, 5
      %s21 = sphi 0, %s21
      %s23 = sphi 0, %s21
      %s24 = sphi 0, %s23
      %s38 = sphi 0, %s24
      %s42 = sphi 0, %s42
      %s44 = sphi 0, %s42
      %s45 = sphi 0, %s44
      %s59 = sphi 0, %s45
      %s65 = sphi 0, %s67
      %s68 = sphi 0, %s65
      %s69 = sphi 0, %s68
      %s85 = sphi 0, %s69
      %s91 = sphi 0, %s93
      %s94 = sphi 0, %s91
      %s95 = sphi 0, %s94
      %s111 = sphi 0, %s95
      %s115 = sphi 0, %s115
      %s117 = sphi 0, %s115
      %s118 = sphi 0, %s117
      %s132 = sphi 0, %s118
    $region4: #{tpu_custom_call.1} parent=1 // loop_header_branch
      %16 = sbr.rel (%p14) target = $region8
    $region5: #{tpu_custom_call.1} parent=1 // loop_body
      %s18 = ssub.s32 %s13, 1
      %s19 = ssub.s32 %s13, 2
      %s20 = sadd.s32 %s13, 1
      %s22 = sadd.s32 %s21, 1
      %p25 = scmp.eq.s32.totalorder %s13, 2
      %p26 = scmp.ne.s32.totalorder %s21, %s23
      %p27 = scmp.eq.s32.totalorder %s13, 0
      %p28 = por %p26, %p27
      %p29 = scmp.ne.s32.totalorder %s21, %s23
      %p30 = scmp.eq.s32.totalorder %s18, 2
      %p31 = por %p29, %p30
      %p32 = scmp.ne.s32.totalorder %s23, %s24
      %p33 = scmp.eq.s32.totalorder %s18, 0
      %p34 = por %p32, %p33
      %p35 = scmp.ne.s32.totalorder %s23, %s24
      %p36 = scmp.eq.s32.totalorder %s19, 2
      %p37 = por %p35, %p36
      %p39 = scmp.ne.s32.totalorder %s24, %s38
      %p40 = scmp.eq.s32.totalorder %s19, 0
      %p41 = por %p39, %p40
      %s43 = sadd.s32 %s42, 1
      %p46 = scmp.eq.s32.totalorder %s13, 2
      %p47 = scmp.ne.s32.totalorder %s42, %s44
      %p48 = scmp.eq.s32.totalorder %s13, 0
      %p49 = por %p47, %p48
      %p50 = scmp.ne.s32.totalorder %s42, %s44
      %p51 = scmp.eq.s32.totalorder %s18, 2
      %p52 = por %p50, %p51
      %p53 = scmp.ne.s32.totalorder %s44, %s45
      %p54 = scmp.eq.s32.totalorder %s18, 0
      %p55 = por %p53, %p54
      %p56 = scmp.ne.s32.totalorder %s44, %s45
      %p57 = scmp.eq.s32.totalorder %s19, 2
      %p58 = por %p56, %p57
      %p60 = scmp.ne.s32.totalorder %s45, %s59
      %p61 = scmp.eq.s32.totalorder %s19, 0
      %p62 = por %p60, %p61
      %s63 = ssub.s32 %s13, %s20
      %p64 = scmp.eq.s32.totalorder %s63, 0
      %s66 = sadd.s32 %s65, 1
      %s67 = scalar_select %p64, %s65, %s66
      %p70 = pneg %p64
      %p71 = scmp.eq.s32.totalorder %s13, 2
      %p72 = por %p70, %p71
      %p73 = scmp.ne.s32.totalorder %s65, %s68
      %p74 = scmp.eq.s32.totalorder %s13, 0
      %p75 = por %p73, %p74
      %p76 = scmp.ne.s32.totalorder %s65, %s68
      %p77 = scmp.eq.s32.totalorder %s18, 2
      %p78 = por %p76, %p77
      %p79 = scmp.ne.s32.totalorder %s68, %s69
      %p80 = scmp.eq.s32.totalorder %s18, 0
      %p81 = por %p79, %p80
      %p82 = scmp.ne.s32.totalorder %s68, %s69
      %p83 = scmp.eq.s32.totalorder %s19, 2
      %p84 = por %p82, %p83
      %p86 = scmp.ne.s32.totalorder %s69, %s85
      %p87 = scmp.eq.s32.totalorder %s19, 0
      %p88 = por %p86, %p87
      %s89 = ssub.s32 %s13, %s20
      %p90 = scmp.eq.s32.totalorder %s89, 0
      %s92 = sadd.s32 %s91, 1
      %s93 = scalar_select %p90, %s91, %s92
      %p96 = pneg %p90
      %p97 = scmp.eq.s32.totalorder %s13, 2
      %p98 = por %p96, %p97
      %p99 = scmp.ne.s32.totalorder %s91, %s94
      %p100 = scmp.eq.s32.totalorder %s13, 0
      %p101 = por %p99, %p100
      %p102 = scmp.ne.s32.totalorder %s91, %s94
      %p103 = scmp.eq.s32.totalorder %s18, 2
      %p104 = por %p102, %p103
      %p105 = scmp.ne.s32.totalorder %s94, %s95
      %p106 = scmp.eq.s32.totalorder %s18, 0
      %p107 = por %p105, %p106
      %p108 = scmp.ne.s32.totalorder %s94, %s95
      %p109 = scmp.eq.s32.totalorder %s19, 2
      %p110 = por %p108, %p109
      %p112 = scmp.ne.s32.totalorder %s95, %s111
      %p113 = scmp.eq.s32.totalorder %s19, 0
      %p114 = por %p112, %p113
      %s116 = sadd.s32 %s115, 1
      %p119 = scmp.eq.s32.totalorder %s13, 2
      %p120 = scmp.ne.s32.totalorder %s115, %s117
      %p121 = scmp.eq.s32.totalorder %s13, 0
      %p122 = por %p120, %p121
      %p123 = scmp.ne.s32.totalorder %s115, %s117
      %p124 = scmp.eq.s32.totalorder %s18, 2
      %p125 = por %p123, %p124
      %p126 = scmp.ne.s32.totalorder %s117, %s118
      %p127 = scmp.eq.s32.totalorder %s18, 0
      %p128 = por %p126, %p127
      %p129 = scmp.ne.s32.totalorder %s117, %s118
      %p130 = scmp.eq.s32.totalorder %s19, 2
      %p131 = por %p129, %p130
      %p133 = scmp.ne.s32.totalorder %s118, %s132
      %p134 = scmp.eq.s32.totalorder %s19, 0
      %p135 = por %p133, %p134
      %p136 = scmp.le.s32.totalorder 1, %s13
      %p137 = scmp.lt.s32.totalorder %s13, 4
      %p138 = pnand %p136, %p137
      %p139 = pneg %p138
      // Predicated region
      $region9: #{tpu_custom_call.1} parent=5 // pred_check
        _
      $region10: #{tpu_custom_call.1} parent=5 // pred_check_branch
        %141 = sbr.rel (%p138) target = $region12
      $region11: #{tpu_custom_call.1} parent=5 // pred_region
        %s142 = ssub.s32 %s13, 1
        // Predicated region
        $region13: #{tpu_custom_call.1} parent=11 // pred_check
          %p143 = pneg %p34
        $region14: #{tpu_custom_call.1} parent=11 // pred_check_branch
          %145 = sbr.rel (%p143) target = $region16
        $region15: #{tpu_custom_call.1} parent=11 // pred_region
          %147 = vsyncadd [#allocation4], 0
          %s148 = sshll.u32 %s0, 4
          %s149 = int_to_ptr.hbm [resolvable:$true] %s148
          %s150 = sshll.u32 [#allocation3], 4
          %s151 = int_to_ptr.vmem [resolvable:$true] %s150
          %156 = dma.hbm_to_vmem [thread:$0]  %s149, 512, %s151, [#allocation4], 64, 64, 4
        $region16: #{tpu_custom_call.1} parent=11 // pred_fallthru
          _
        // Predicated region
        $region17: #{tpu_custom_call.1} parent=11 // pred_check
          %p157 = pneg %p55
        $region18: #{tpu_custom_call.1} parent=11 // pred_check_branch
          %159 = sbr.rel (%p157) target = $region20
        $region19: #{tpu_custom_call.1} parent=11 // pred_region
          %161 = vsyncadd [#allocation7], 0
          %s162 = sshll.u32 %s1, 4
          %s163 = int_to_ptr.hbm [resolvable:$true] %s162
          %s164 = sshll.u32 [#allocation6], 4
          %s165 = int_to_ptr.vmem [resolvable:$true] %s164
          %170 = dma.hbm_to_vmem [thread:$0]  %s163, 1024, %s165, [#allocation7], 128, 128, 8
        $region20: #{tpu_custom_call.1} parent=11 // pred_fallthru
          _
      $region12: #{tpu_custom_call.1} parent=5 // pred_fallthru
        _
      %p171 = scmp.lt.s32.totalorder %s13, 3
      // Predicated region
      $region21: #{tpu_custom_call.1} parent=5 // pred_check
        %p172 = pneg %p171
      $region22: #{tpu_custom_call.1} parent=5 // pred_check_branch
        %174 = sbr.rel (%p172) target = $region24
      $region23: #{tpu_custom_call.1} parent=5 // pred_region
        // Predicated region
        $region25: #{tpu_custom_call.1} parent=23 // pred_check
          %p175 = pneg %p75
        $region26: #{tpu_custom_call.1} parent=23 // pred_check_branch
          %177 = sbr.rel (%p175) target = $region28
        $region27: #{tpu_custom_call.1} parent=23 // pred_region
          %s178 = sand.u32 %s13, 1
          %s179 = scalar_lea.sflag [#allocation4], %s178
          %s180 = sand.u32 %s65, 1
          %s181 = smul.addr %s180, 128
          %s182 = scalar_lea.vmem [#allocation8], %s181
          %184 = vsyncadd %s179, 0
          %s185 = smul.addr %s13, 32
          %s186 = smul.addr %s185, 4
          %s187 = scalar_lea.hbm %s2, %s186
          %s188 = sshll.u32 %s187, 4
          %s189 = int_to_ptr.hbm [resolvable:$true] %s188
          %s190 = sshll.u32 %s182, 4
          %s191 = int_to_ptr.vmem [resolvable:$true] %s190
          %196 = dma.hbm_to_vmem [thread:$0]  %s189, 2048, %s191, %s179, 128, 128, 8
        $region28: #{tpu_custom_call.1} parent=23 // pred_fallthru
          _
        // Predicated region
        $region29: #{tpu_custom_call.1} parent=23 // pred_check
          %p197 = pneg %p101
        $region30: #{tpu_custom_call.1} parent=23 // pred_check_branch
          %199 = sbr.rel (%p197) target = $region32
        $region31: #{tpu_custom_call.1} parent=23 // pred_region
          %s200 = sand.u32 %s13, 1
          %s201 = scalar_lea.sflag [#allocation4], %s200
          %s202 = sand.u32 %s91, 1
          %s203 = scalar_lea.vmem [#allocation9], %s202
          %205 = vsyncadd %s201, 0
          %s206 = scalar_lea.hbm %s3, %s13
          %s208 = sshll.u32 %s206, 4
          %s209 = int_to_ptr.hbm [resolvable:$true] %s208
          %s210 = sshll.u32 %s203, 4
          %s211 = int_to_ptr.vmem [resolvable:$true] %s210
          %213 = dma.hbm_to_vmem [thread:$0]  %s209, 16, %s211, %s201
        $region32: #{tpu_custom_call.1} parent=23 // pred_fallthru
          _
      $region24: #{tpu_custom_call.1} parent=5 // pred_fallthru
        _
      %p214 = scmp.le.s32.totalorder 1, %s13
      %p215 = scmp.lt.s32.totalorder %s13, 4
      %p216 = pnand %p214, %p215
      %p217 = pneg %p216
      // Predicated region
      $region33: #{tpu_custom_call.1} parent=5 // pred_check
        _
      $region34: #{tpu_custom_call.1} parent=5 // pred_check_branch
        %219 = sbr.rel (%p216) target = $region36
      $region35: #{tpu_custom_call.1} parent=5 // pred_region
        %s220 = ssub.s32 %s13, 1
        // Predicated region
        $region37: #{tpu_custom_call.1} parent=35 // pred_check
          %p221 = pneg %p34
        $region38: #{tpu_custom_call.1} parent=35 // pred_check_branch
          %223 = sbr.rel (%p221) target = $region40
        $region39: #{tpu_custom_call.1} parent=35 // pred_region
          %225 = dma.done [#allocation4], 512
        $region40: #{tpu_custom_call.1} parent=35 // pred_fallthru
          _
        // Predicated region
        $region41: #{tpu_custom_call.1} parent=35 // pred_check
          %p226 = pneg %p55
        $region42: #{tpu_custom_call.1} parent=35 // pred_check_branch
          %228 = sbr.rel (%p226) target = $region44
        $region43: #{tpu_custom_call.1} parent=35 // pred_region
          %230 = dma.done [#allocation7], 1024
        $region44: #{tpu_custom_call.1} parent=35 // pred_fallthru
          _
        %s231 = sand.u32 %s18, 1
        %s232 = scalar_lea.sflag [#allocation4], %s231
        %s233 = sand.u32 %s68, 1
        %s234 = smul.addr %s233, 128
        %s235 = scalar_lea.vmem [#allocation8], %s234
        // Predicated region
        $region45: #{tpu_custom_call.1} parent=35 // pred_check
          %p236 = pneg %p81
        $region46: #{tpu_custom_call.1} parent=35 // pred_check_branch
          %238 = sbr.rel (%p236) target = $region48
        $region47: #{tpu_custom_call.1} parent=35 // pred_region
          %240 = dma.done %s232, 2048
        $region48: #{tpu_custom_call.1} parent=35 // pred_fallthru
          _
        %s241 = sand.u32 %s18, 1
        %s242 = scalar_lea.sflag [#allocation4], %s241
        %s243 = sand.u32 %s94, 1
        %s244 = scalar_lea.vmem [#allocation9], %s243
        // Predicated region
        $region49: #{tpu_custom_call.1} parent=35 // pred_check
          %p245 = pneg %p107
        $region50: #{tpu_custom_call.1} parent=35 // pred_check_branch
          %247 = sbr.rel (%p245) target = $region52
        $region51: #{tpu_custom_call.1} parent=35 // pred_region
          %249 = dma.done %s242, 16
        $region52: #{tpu_custom_call.1} parent=35 // pred_fallthru
          _
        %p250 = pneg %p34
        %p251 = pneg %p31
        %p252 = pneg %p55
        %p253 = pneg %p52
        %s254 = sand.u32 %s18, 1
        %s255 = scalar_lea.sflag [#allocation4], %s254
        %s256 = sand.u32 %s68, 1
        %s257 = smul.addr %s256, 128
        %s258 = scalar_lea.vmem [#allocation8], %s257
        %p259 = pneg %p81
        %p260 = pneg %p78
        %s261 = sand.u32 %s18, 1
        %s262 = scalar_lea.sflag [#allocation4], %s261
        %s263 = sand.u32 %s94, 1
        %s264 = scalar_lea.vmem [#allocation9], %s263
        %p265 = pneg %p107
        %p266 = pneg %p104
        %p267 = pneg %p128
        %p268 = pneg %p125
        %p270 = scmp.eq.s32.totalorder %s18, 0
        // Predicated region
        $region53: #{tpu_custom_call.1} parent=35 // pred_check
          %p271 = pneg %p270
        $region54: #{tpu_custom_call.1} parent=35 // pred_check_branch
          %273 = sbr.rel (%p271) target = $region56
        $region55: #{tpu_custom_call.1} parent=35 // pred_region
          %v274 = vld [vmem:[#allocation6] sm:$0xff]
          %v275 = vld [vmem:[#allocation6 + $0x8] sm:$0xff]
          %v276 = vld [vmem:[#allocation6 + $0x10] sm:$0xff]
          %v277 = vld [vmem:[#allocation6 + $0x18] sm:$0xff]
          %v278 = vld [vmem:[#allocation6 + $0x20] sm:$0xff]
          %v279 = vld [vmem:[#allocation6 + $0x28] sm:$0xff]
          %v280 = vld [vmem:[#allocation6 + $0x30] sm:$0xff]
          %v281 = vld [vmem:[#allocation6 + $0x38] sm:$0xff]
          %282 = vst [vmem:[#allocation2] sm:$0xff] %v274
          %283 = vst [vmem:[#allocation2 + $0x8] sm:$0xff] %v275
          %284 = vst [vmem:[#allocation2 + $0x10] sm:$0xff] %v276
          %285 = vst [vmem:[#allocation2 + $0x18] sm:$0xff] %v277
          %286 = vst [vmem:[#allocation2 + $0x20] sm:$0xff] %v278
          %287 = vst [vmem:[#allocation2 + $0x28] sm:$0xff] %v279
          %288 = vst [vmem:[#allocation2 + $0x30] sm:$0xff] %v280
          %289 = vst [vmem:[#allocation2 + $0x38] sm:$0xff] %v281
        $region56: #{tpu_custom_call.1} parent=35 // pred_fallthru
          _
        %v290 = vld [vmem:[#allocation2] sm:$0xff]
        %v291 = vld [vmem:[#allocation2 + $0x8] sm:$0xff]
        %v292 = vld [vmem:[#allocation2 + $0x10] sm:$0xff]
        %v293 = vld [vmem:[#allocation2 + $0x18] sm:$0xff]
        %v294 = vld [vmem:[#allocation2 + $0x20] sm:$0xff]
        %v295 = vld [vmem:[#allocation2 + $0x28] sm:$0xff]
        %v296 = vld [vmem:[#allocation2 + $0x30] sm:$0xff]
        %v297 = vld [vmem:[#allocation2 + $0x38] sm:$0xff]
        %v298 = vpack.c.bf16 %v291, %v290
        %v299 = vpack.c.bf16 %v293, %v292
        %v300 = vpack.c.bf16 %v295, %v294
        %v301 = vpack.c.bf16 %v297, %v296
        %v302 = vld [vmem:[%s235] sm:$0xff]
        %v303 = vld [vmem:[%s235 + $0x8] sm:$0xff]
        %v304 = vld [vmem:[%s235 + $0x10] sm:$0xff]
        %v305 = vld [vmem:[%s235 + $0x18] sm:$0xff]
        %v306 = vld [vmem:[%s235 + $0x20] sm:$0xff]
        %v307 = vld [vmem:[%s235 + $0x28] sm:$0xff]
        %v308 = vld [vmem:[%s235 + $0x30] sm:$0xff]
        %v309 = vld [vmem:[%s235 + $0x38] sm:$0xff]
        %v310 = vld [vmem:[%s235 + $0x40] sm:$0xff]
        %v311 = vld [vmem:[%s235 + $0x48] sm:$0xff]
        %v312 = vld [vmem:[%s235 + $0x50] sm:$0xff]
        %v313 = vld [vmem:[%s235 + $0x58] sm:$0xff]
        %v314 = vld [vmem:[%s235 + $0x60] sm:$0xff]
        %v315 = vld [vmem:[%s235 + $0x68] sm:$0xff]
        %v316 = vld [vmem:[%s235 + $0x70] sm:$0xff]
        %v317 = vld [vmem:[%s235 + $0x78] sm:$0xff]
        %v334 = vunpack.c.l.b16 %v302
        %v335 = vunpack.c.h.b16 %v302
        %v336 = vunpack.c.l.b16 %v303
        %v337 = vunpack.c.h.b16 %v303
        %v338 = vunpack.c.l.b16 %v304
        %v339 = vunpack.c.h.b16 %v304
        %v340 = vunpack.c.l.b16 %v305
        %v341 = vunpack.c.h.b16 %v305
        %v342 = vunpack.c.l.b16 %v306
        %v343 = vunpack.c.h.b16 %v306
        %v344 = vunpack.c.l.b16 %v307
        %v345 = vunpack.c.h.b16 %v307
        %v346 = vunpack.c.l.b16 %v308
        %v347 = vunpack.c.h.b16 %v308
        %v348 = vunpack.c.l.b16 %v309
        %v349 = vunpack.c.h.b16 %v309
        %v350 = vunpack.c.l.b16 %v310
        %v351 = vunpack.c.h.b16 %v310
        %v352 = vunpack.c.l.b16 %v311
        %v353 = vunpack.c.h.b16 %v311
        %v354 = vunpack.c.l.b16 %v312
        %v355 = vunpack.c.h.b16 %v312
        %v356 = vunpack.c.l.b16 %v313
        %v357 = vunpack.c.h.b16 %v313
        %v358 = vunpack.c.l.b16 %v314
        %v359 = vunpack.c.h.b16 %v314
        %v360 = vunpack.c.l.b16 %v315
        %v361 = vunpack.c.h.b16 %v315
        %v362 = vunpack.c.l.b16 %v316
        %v363 = vunpack.c.h.b16 %v316
        %v364 = vunpack.c.l.b16 %v317
        %v365 = vunpack.c.h.b16 %v317
        %v366 = vpack.c.b16 %v336, %v334
        %v367 = vpack.c.b16 %v337, %v335
        %v368 = vpack.c.b16 %v340, %v338
        %v369 = vpack.c.b16 %v341, %v339
        %v370 = vpack.c.b16 %v344, %v342
        %v371 = vpack.c.b16 %v345, %v343
        %v372 = vpack.c.b16 %v348, %v346
        %v373 = vpack.c.b16 %v349, %v347
        %v374 = vpack.c.b16 %v352, %v350
        %v375 = vpack.c.b16 %v353, %v351
        %v376 = vpack.c.b16 %v356, %v354
        %v377 = vpack.c.b16 %v357, %v355
        %v378 = vpack.c.b16 %v360, %v358
        %v379 = vpack.c.b16 %v361, %v359
        %v380 = vpack.c.b16 %v364, %v362
        %v381 = vpack.c.b16 %v365, %v363
        %398 = vmatpush.bf16.msra.mxu0 %v380
        %399 = vmatpush.bf16.msra.mxu0 %v378
        %400 = vmatpush.bf16.msra.mxu0 %v376
        %401 = vmatpush.bf16.msra.mxu0 %v374
        %402 = vmatpush.bf16.msra.mxu0 %v372
        %403 = vmatpush.bf16.msra.mxu0 %v370
        %404 = vmatpush.bf16.msra.mxu0 %v368
        %405 = vmatpush.bf16.msra.mxu0 %v366
        %406 = vmatmul.bf16.gmra.mxu0 %v298
        %v407 = vpop.f32.mrf.mxu0
        %v408 = vadd.f32 0.0, %v407
        %v409 = vpop.f32.mrf.mxu0
        %v410 = vadd.f32 0.0, %v409
        %411 = vmatmul.bf16.gmra.mxu0 %v299
        %v412 = vpop.f32.mrf.mxu0
        %v413 = vadd.f32 0.0, %v412
        %v414 = vpop.f32.mrf.mxu0
        %v415 = vadd.f32 0.0, %v414
        %416 = vmatmul.bf16.gmra.mxu0 %v300
        %v417 = vpop.f32.mrf.mxu0
        %v418 = vadd.f32 0.0, %v417
        %v419 = vpop.f32.mrf.mxu0
        %v420 = vadd.f32 0.0, %v419
        %421 = vmatmul.bf16.gmra.mxu0 %v301
        %v422 = vpop.f32.mrf.mxu0
        %v423 = vadd.f32 0.0, %v422
        %v424 = vpop.f32.mrf.mxu0
        %v425 = vadd.f32 0.0, %v424
        %426 = vdwg.mxu0
        %427 = vmatpush.bf16.msra.mxu0 %v381
        %428 = vmatpush.bf16.msra.mxu0 %v379
        %429 = vmatpush.bf16.msra.mxu0 %v377
        %430 = vmatpush.bf16.msra.mxu0 %v375
        %431 = vmatpush.bf16.msra.mxu0 %v373
        %432 = vmatpush.bf16.msra.mxu0 %v371
        %433 = vmatpush.bf16.msra.mxu0 %v369
        %434 = vmatpush.bf16.msra.mxu0 %v367
        %435 = vmatmul.bf16.gmra.mxu0 %v298
        %v436 = vpop.f32.mrf.mxu0
        %v437 = vadd.f32 0.0, %v436
        %v438 = vpop.f32.mrf.mxu0
        %v439 = vadd.f32 0.0, %v438
        %440 = vmatmul.bf16.gmra.mxu0 %v299
        %v441 = vpop.f32.mrf.mxu0
        %v442 = vadd.f32 0.0, %v441
        %v443 = vpop.f32.mrf.mxu0
        %v444 = vadd.f32 0.0, %v443
        %445 = vmatmul.bf16.gmra.mxu0 %v300
        %v446 = vpop.f32.mrf.mxu0
        %v447 = vadd.f32 0.0, %v446
        %v448 = vpop.f32.mrf.mxu0
        %v449 = vadd.f32 0.0, %v448
        %450 = vmatmul.bf16.gmra.mxu0 %v301
        %v451 = vpop.f32.mrf.mxu0
        %v452 = vadd.f32 0.0, %v451
        %v453 = vpop.f32.mrf.mxu0
        %v454 = vadd.f32 0.0, %v453
        %455 = vdwg.mxu0
        %v456 = vld [vmem:[#allocation3] sm:$0xf]
        %v457 = vld [vmem:[#allocation3 + $0x4] sm:$0xf]
        %v458 = vld [vmem:[#allocation3 + $0x8] sm:$0xf]
        %v459 = vld [vmem:[#allocation3 + $0xc] sm:$0xf]
        %v460 = vld [vmem:[#allocation3 + $0x10] sm:$0xf]
        %v461 = vld [vmem:[#allocation3 + $0x14] sm:$0xf]
        %v462 = vld [vmem:[#allocation3 + $0x18] sm:$0xf]
        %v463 = vld [vmem:[#allocation3 + $0x1c] sm:$0xf]
        %v464 = vpack.c.bf16 %v439, %v437
        %v465 = vpack.c.bf16 %v444, %v442
        %v466 = vpack.c.bf16 %v449, %v447
        %v467 = vpack.c.bf16 %v454, %v452
        %v476 = vunpack.c.l.b16 %v456
        %v477 = vunpack.c.l.b16 %v457
        %v478 = vunpack.c.l.b16 %v458
        %v479 = vunpack.c.l.b16 %v459
        %v480 = vunpack.c.l.b16 %v460
        %v481 = vunpack.c.l.b16 %v461
        %v482 = vunpack.c.l.b16 %v462
        %v483 = vunpack.c.l.b16 %v463
        %v484 = vpack.c.b16 %v477, %v476
        %v485 = vpack.c.b16 %v479, %v478
        %v486 = vpack.c.b16 %v481, %v480
        %v487 = vpack.c.b16 %v483, %v482
        %vm488 = vcmask 523264
        %v490 = vsel %vm488, %v484, 0
        %v493 = vsel %vm488, %v485, 0
        %v496 = vsel %vm488, %v486, 0
        %v499 = vsel %vm488, %v487, 0
        %501 = vmatpush.bf16.msra.mxu0 0
        %502 = vmatpush.bf16.msra.mxu0 0
        %503 = vmatpush.bf16.msra.mxu0 0
        %504 = vmatpush.bf16.msra.mxu0 0
        %505 = vmatpush.bf16.msra.mxu0 %v467
        %506 = vmatpush.bf16.msra.mxu0 %v466
        %507 = vmatpush.bf16.msra.mxu0 %v465
        %508 = vmatpush.bf16.msra.mxu0 %v464
        %509 = vmatmul.bf16.gmra.mxu0 %v490
        %v510 = vpop.f32.mrf.mxu0
        %v511 = vadd.f32 0.0, %v510
        %v512 = vpop.f32.mrf.mxu0
        %v513 = vadd.f32 0.0, %v512
        %514 = vmatmul.bf16.gmra.mxu0 %v493
        %v515 = vpop.f32.mrf.mxu0
        %v516 = vadd.f32 0.0, %v515
        %v517 = vpop.f32.mrf.mxu0
        %v518 = vadd.f32 0.0, %v517
        %519 = vmatmul.bf16.gmra.mxu0 %v496
        %v520 = vpop.f32.mrf.mxu0
        %v521 = vadd.f32 0.0, %v520
        %v522 = vpop.f32.mrf.mxu0
        %v523 = vadd.f32 0.0, %v522
        %524 = vmatmul.bf16.gmra.mxu0 %v499
        %v525 = vpop.f32.mrf.mxu0
        %v526 = vadd.f32 0.0, %v525
        %v527 = vpop.f32.mrf.mxu0
        %v528 = vadd.f32 0.0, %v527
        %529 = vdwg.mxu0
        %v530 = vadd.f32 %v408, %v511
        %v531 = vadd.f32 %v410, %v513
        %v532 = vadd.f32 %v413, %v516
        %v533 = vadd.f32 %v415, %v518
        %v534 = vadd.f32 %v418, %v521
        %v535 = vadd.f32 %v420, %v523
        %v536 = vadd.f32 %v423, %v526
        %v537 = vadd.f32 %v425, %v528
        %v538 = vld [vmem:[%s244] sm:$0x1]
        %v540 = vperm.slane %v538, 0
        %v542 = vadd.f32 %v530, %v540
        %v543 = vadd.f32 %v531, %v540
        %v544 = vadd.f32 %v532, %v540
        %v545 = vadd.f32 %v533, %v540
        %v546 = vadd.f32 %v534, %v540
        %v547 = vadd.f32 %v535, %v540
        %v548 = vadd.f32 %v536, %v540
        %v549 = vadd.f32 %v537, %v540
        %p550 = scmp.lt.s32.totalorder %s18, 2
        // Predicated region
        $region57: #{tpu_custom_call.1} parent=35 // pred_check
          %p551 = pneg %p550
        $region58: #{tpu_custom_call.1} parent=35 // pred_check_branch
          %553 = sbr.rel (%p551) target = $region60
        $region59: #{tpu_custom_call.1} parent=35 // pred_region
          %v554 = vmax.f32 %v542, 0.0
          %v555 = vmax.f32 %v543, 0.0
          %v556 = vmax.f32 %v544, 0.0
          %v557 = vmax.f32 %v545, 0.0
          %v558 = vmax.f32 %v546, 0.0
          %v559 = vmax.f32 %v547, 0.0
          %v560 = vmax.f32 %v548, 0.0
          %v561 = vmax.f32 %v549, 0.0
          %562 = vst [vmem:[#allocation2] sm:$0xff] %v554
          %563 = vst [vmem:[#allocation2 + $0x8] sm:$0xff] %v555
          %564 = vst [vmem:[#allocation2 + $0x10] sm:$0xff] %v556
          %565 = vst [vmem:[#allocation2 + $0x18] sm:$0xff] %v557
          %566 = vst [vmem:[#allocation2 + $0x20] sm:$0xff] %v558
          %567 = vst [vmem:[#allocation2 + $0x28] sm:$0xff] %v559
          %568 = vst [vmem:[#allocation2 + $0x30] sm:$0xff] %v560
          %569 = vst [vmem:[#allocation2 + $0x38] sm:$0xff] %v561
        $region60: #{tpu_custom_call.1} parent=35 // pred_fallthru
          _
        %p570 = scmp.eq.s32.totalorder %s18, 2
        // Predicated region
        $region61: #{tpu_custom_call.1} parent=35 // pred_check
          %p571 = pneg %p570
        $region62: #{tpu_custom_call.1} parent=35 // pred_check_branch
          %573 = sbr.rel (%p571) target = $region64
        $region63: #{tpu_custom_call.1} parent=35 // pred_region
          %574 = vst [vmem:[#allocation10] sm:$0xff] %v542
          %575 = vst [vmem:[#allocation10 + $0x8] sm:$0xff] %v543
          %576 = vst [vmem:[#allocation10 + $0x10] sm:$0xff] %v544
          %577 = vst [vmem:[#allocation10 + $0x18] sm:$0xff] %v545
          %578 = vst [vmem:[#allocation10 + $0x20] sm:$0xff] %v546
          %579 = vst [vmem:[#allocation10 + $0x28] sm:$0xff] %v547
          %580 = vst [vmem:[#allocation10 + $0x30] sm:$0xff] %v548
          %581 = vst [vmem:[#allocation10 + $0x38] sm:$0xff] %v549
        $region64: #{tpu_custom_call.1} parent=35 // pred_fallthru
          _
        // Predicated region
        $region65: #{tpu_custom_call.1} parent=35 // pred_check
          %p582 = pneg %p125
        $region66: #{tpu_custom_call.1} parent=35 // pred_check_branch
          %584 = sbr.rel (%p582) target = $region68
        $region67: #{tpu_custom_call.1} parent=35 // pred_region
          %586 = vsyncadd [#allocation5], 0
          %s587 = sshll.u32 [#allocation10], 4
          %s588 = int_to_ptr.vmem [resolvable:$true] %s587
          %s589 = sshll.u32 %s4, 4
          %s590 = int_to_ptr.hbm [resolvable:$true] %s589
          %595 = dma.vmem_to_hbm [thread:$0]  %s588, 1024, %s590, [#allocation5], 128, 128, 8
        $region68: #{tpu_custom_call.1} parent=35 // pred_fallthru
          _
        // Predicated region
        $region69: #{tpu_custom_call.1} parent=35 // pred_check
          %p596 = pneg %p125
        $region70: #{tpu_custom_call.1} parent=35 // pred_check_branch
          %598 = sbr.rel (%p596) target = $region72
        $region71: #{tpu_custom_call.1} parent=35 // pred_region
          %600 = dma.done [#allocation5], 1024
        $region72: #{tpu_custom_call.1} parent=35 // pred_fallthru
          _
      $region36: #{tpu_custom_call.1} parent=5 // pred_fallthru
        _
      %p601 = scmp.le.s32.totalorder 2, %s13
      // Predicated region
      $region73: #{tpu_custom_call.1} parent=5 // pred_check
        %p602 = pneg %p601
      $region74: #{tpu_custom_call.1} parent=5 // pred_check_branch
        %604 = sbr.rel (%p602) target = $region76
      $region75: #{tpu_custom_call.1} parent=5 // pred_region
        %s605 = ssub.s32 %s13, 2
      $region76: #{tpu_custom_call.1} parent=5 // pred_fallthru
        _
    $region6: #{tpu_custom_call.1} parent=1 // loop_footer
      %s17 = sadd.s32 1, %s13
    $region7: #{tpu_custom_call.1} parent=1 // loop_footer_branch
      %12 = sbr.rel target = $region3
    $region8: #{tpu_custom_call.1} parent=1 // loop_exit
      _
    %606 = vsyncpa [#allocation4], 1
    %s607 = scalar_lea.sflag [#allocation4], 1
    %608 = vsyncpa %s607, 1
    %609 = vsyncpa [#allocation7], 1
    %610 = vsyncpa [#allocation5], 1
    %s611 = scalar_lea.sflag [#allocation5], 1
    %612 = vsyncpa %s611, 1

</llo_original>
